<compile_context>
chip_gen: v6e
topology: v6e:2x2x1
jax: 0.10.0
libtpu: 0.0.40
codegen_flags: <defaults>
</compile_context>

<pallas_src>
import functools
import math

import jax
import jax.numpy as jnp
from jax.experimental import pallas as pl
from jax.experimental.pallas import tpu as pltpu


def _rup(n, m):
    return ((n + m - 1) // m) * m


def _fused_kernel(scale_ref, act_ref, state_ref, w_ref, x_out_ref, state_out_ref, *,
                  layout, num_stacks, hidden_size, input_size, output_size,
                  p, preprocess):
    """Fused step: LogAndSign -> stacked LSTM cell (seq_len==1) -> Linear -> x + lr*update.

    act_ref   : (B, Ipad+Opad) f32 — grads in lanes [0:input_size], x in lanes [Ipad:Ipad+output_size]
    state_ref : (B, Spad) f32      — h_l at lanes [l*H:(l+1)*H], c_l at [(L+l)*H:(L+l+1)*H]
    w_ref     : (R, Wpad) packed weight slab (param_dtype); static row offsets from `layout`
    outputs   : x_out (B, Opad) dense; state_out (B, Spad) dense, aliased to state_ref.
    """
    H = hidden_size
    L = num_stacks
    Ipad = layout["ipad"]
    Opad = layout["opad"]
    mm_dtype = w_ref.dtype
    lr = scale_ref[0]

    g = act_ref[:, :input_size].astype(jnp.float32)              # (B, input_size)

    if preprocess:
        # LogAndSign preprocessing; log(|0|) = -inf clamps to -1 (matches torch.clamp).
        log_part = jnp.clip(jnp.log(jnp.abs(g)) / float(p), -1.0, 1.0)
        # TODO(synk): torch code does exp(torch.Tensor(p)) on an *uninitialized*
        # tensor; we implement the intended scalar exp(p) * g here.
        sign_part = jnp.clip(math.exp(float(p)) * g, -1.0, 1.0)
        inp = None
    else:
        inp = g

    # Shared bias block: row `l` = layer-l (b_ih+b_hh), row L = b_lin*output_scale.
    bias_blk = w_ref[layout["bias_off"]:layout["bias_off"] + layout["bias_rows"], :]
    bias_blk = bias_blk.astype(jnp.float32)                      # (bias_rows, Wpad)

    # Stacked LSTM, single timestep.  Gate order matches nn.LSTM: [i, f, g, o].
    for layer in range(L):
        lay = layout["layers"][layer]
        h = state_ref[:, layer * H:(layer + 1) * H].astype(jnp.float32)          # (B, H)
        c = state_ref[:, (L + layer) * H:(L + layer + 1) * H].astype(jnp.float32)  # (B, H)

        if layer == 0 and preprocess:
            # Layer-0 W_ih is stored split into log-rows / sign-rows -> no lane concat.
            w_log = w_ref[lay["wlog_off"]:lay["wlog_off"] + input_size, :]
            w_sign = w_ref[lay["wsign_off"]:lay["wsign_off"] + input_size, :]
            gates = (jnp.dot(log_part.astype(mm_dtype), w_log,
                             preferred_element_type=jnp.float32)
                     + jnp.dot(sign_part.astype(mm_dtype), w_sign,
                               preferred_element_type=jnp.float32))
        else:
            d_in = lay["d_in"]
            w_ih = w_ref[lay["wih_off"]:lay["wih_off"] + d_in, :]
            gates = jnp.dot(inp.astype(mm_dtype), w_ih,
                            preferred_element_type=jnp.float32)

        w_hh = w_ref[lay["whh_off"]:lay["whh_off"] + H, :]
        gates = (gates
                 + jnp.dot(h.astype(mm_dtype), w_hh,
                           preferred_element_type=jnp.float32)
                 + bias_blk[layer:layer + 1, :])                 # (B, Wpad), cols 0:4H valid

        # One sigmoid pass + one tanh pass over the full gate tile, then slice.
        sig_all = jax.nn.sigmoid(gates)
        tanh_all = jnp.tanh(gates)
        i_g = sig_all[:, 0 * H:1 * H]
        f_g = sig_all[:, 1 * H:2 * H]
        o_g = sig_all[:, 3 * H:4 * H]
        g_g = tanh_all[:, 2 * H:3 * H]

        c_new = f_g * c + i_g * g_g
        h_new = o_g * jnp.tanh(c_new)

        state_out_ref[:, layer * H:(layer + 1) * H] = h_new
        state_out_ref[:, (L + layer) * H:(L + layer + 1) * H] = c_new
        inp = h_new                                              # feed next layer

    # Final Linear (output_scale pre-folded into the packed weights) * lr, plus residual.
    w_lin = w_ref[layout["wlin_off"]:layout["wlin_off"] + H, :]
    update = (jnp.dot(inp.astype(mm_dtype), w_lin,
                      preferred_element_type=jnp.float32)
              + bias_blk[L:L + 1, :]) * lr                       # (B, Wpad)
    x_pad = act_ref[:, Ipad:Ipad + Opad]
    # Full-width unmasked store: padding lanes of W_lin/b_lin (and of x_pad) are zero.
    x_out_ref[...] = x_pad + update[:, :Opad]


class LSTMBlackBoxOptimizeeLR:
    """JAX/Pallas port of LSTM_BlackBox_Optimizee_Model_lr (forward only)."""

    def __init__(self, input_size, output_size, hidden_size, num_stacks, batchsize,
                 preprocess=True, p=10, output_scale=1, key=None,
                 param_dtype=jnp.bfloat16):
        # bf16 weights on all TPU generations (bf16-native MXU everywhere);
        # gate math, cell/hidden state and matmul accumulation stay f32.
        self.input_size = input_size
        self.output_size = output_size
        self.hidden_size = hidden_size
        self.num_stacks = num_stacks
        self.batchsize = batchsize
        self.preprocess = preprocess
        self.p = p
        self.output_scale = output_scale
        self.param_dtype = param_dtype
        self.input_flag = 2 if preprocess else 1

        if key is None:
            key = jax.random.PRNGKey(0)

        H = hidden_size
        in_dim = input_size * self.input_flag
        k_lstm = 1.0 / math.sqrt(H)
        Wpad = _rup(max(4 * H, output_size), 128)                 # lane-padded slab width
        row_align = 8 * (4 // jnp.dtype(param_dtype).itemsize)    # 8 for f32, 16 for bf16

        self._ipad = _rup(input_size, 128)
        self._opad = _rup(output_size, 128)
        self._spad = _rup(2 * num_stacks * H, 128)

        # NOTE: for non-demo configs with input_size/hidden_size not multiples of 8,
        # slab row slices become sub-tile masked accesses — still correct.
        blocks = []
        row_cursor = [0]

        def add_block(n_data_rows, data):
            rows = _rup(n_data_rows, row_align)
            blk = jnp.zeros((rows, Wpad), jnp.float32)
            blk = blk.at[:data.shape[0], :data.shape[1]].set(data)
            blocks.append(blk)
            off = row_cursor[0]
            row_cursor[0] += rows
            return off

        self._ref_weights = []   # flat: per-layer [W_ih, W_hh, b], then W_lin, b_lin
        layout_layers = []
        bias_rows = []
        for layer in range(num_stacks):
            key, k1, k2, k3, k4 = jax.random.split(key, 5)
            d_in = in_dim if layer == 0 else H
            # Stored transposed (D_in, 4H) so the kernel does x @ W.
            W_ih = jax.random.uniform(k1, (d_in, 4 * H), jnp.float32, -k_lstm, k_lstm)
            W_hh = jax.random.uniform(k2, (H, 4 * H), jnp.float32, -k_lstm, k_lstm)
            b_ih = jax.random.uniform(k3, (1, 4 * H), jnp.float32, -k_lstm, k_lstm)
            b_hh = jax.random.uniform(k4, (1, 4 * H), jnp.float32, -k_lstm, k_lstm)
            self._ref_weights += [W_ih, W_hh, b_ih + b_hh]

            lay = {"d_in": d_in}
            if layer == 0 and preprocess:
                lay["wlog_off"] = add_block(input_size, W_ih[:input_size])
                lay["wsign_off"] = add_block(input_size, W_ih[input_size:])
            else:
                lay["wih_off"] = add_block(d_in, W_ih)
            lay["whh_off"] = add_block(H, W_hh)
            bias_rows.append(b_ih + b_hh)
            layout_layers.append(lay)

        key, k5, k6 = jax.random.split(key, 3)
        k_lin = 1.0 / math.sqrt(H)
        W_lin = jax.random.uniform(k5, (H, output_size), jnp.float32, -k_lin, k_lin)
        b_lin = jax.random.uniform(k6, (1, output_size), jnp.float32, -k_lin, k_lin)
        self._ref_weights += [W_lin, b_lin]
        # Fold output_scale into the packed linear weights (one less runtime mul).
        wlin_off = add_block(H, W_lin * float(output_scale))
        bias_rows.append(b_lin * float(output_scale))

        # All bias rows share ONE row block: row l = layer-l bias, row L = linear bias.
        nbias = num_stacks + 1
        bias_data = jnp.zeros((nbias, Wpad), jnp.float32)
        for r, row in enumerate(bias_rows):
            bias_data = bias_data.at[r, :row.shape[1]].set(row[0])
        bias_off = add_block(nbias, bias_data)

        self._layout = {"layers": layout_layers,
                        "wlin_off": wlin_off,
                        "bias_off": bias_off,
                        "bias_rows": _rup(nbias, row_align),
                        "wpad": Wpad,
                        "ipad": self._ipad,
                        "opad": self._opad}
        self.w_slab = jnp.concatenate(blocks, axis=0).astype(param_dtype)

    @staticmethod
    def learn_rate(initial_lr, gamma, step, min_lr=1e-06):
        return initial_lr * gamma ** step

    def unpack_state(self, packed):
        """Packed lane-dense (B, Spad) state -> (h (L,B,H), c (L,B,H))."""
        B, H, L = self.batchsize, self.hidden_size, self.num_stacks
        hc = packed[:, :2 * L * H].reshape(B, 2 * L, H)
        hc = jnp.transpose(hc, (1, 0, 2))
        return hc[:L], hc[L:]

    def __call__(self, x, input_gradients, prev_state, i):
        B, H, L = self.batchsize, self.hidden_size, self.num_stacks
        Ipad, Opad, Spad = self._ipad, self._opad, self._spad

        # Single lane-padded activation input slab (grads + x -> one DMA).
        act = jnp.zeros((B, Ipad + Opad), jnp.float32)
        act = act.at[:, :self.input_size].set(input_gradients.astype(jnp.float32))
        act = act.at[:, Ipad:Ipad + self.output_size].set(x.astype(jnp.float32))

        if prev_state is None:
            state0 = jnp.zeros((B, Spad), jnp.float32)
        elif isinstance(prev_state, tuple):
            h0, c0 = prev_state
            hc = jnp.concatenate([jnp.asarray(h0), jnp.asarray(c0)], axis=0)  # (2L, B, H)
            hc = jnp.transpose(hc, (1, 0, 2)).reshape(B, 2 * L * H)
            state0 = jnp.zeros((B, Spad), jnp.float32).at[:, :2 * L * H].set(hc)
        else:
            # Already packed (B, Spad) from a previous call; updated in place via aliasing.
            state0 = prev_state

        lr = self.learn_rate(initial_lr=5e-05, gamma=0.96, step=i)
        scale = jnp.array([lr], jnp.float32)    # 1-D SMEM scalar (no 2-D SMEM padding)

        kernel = functools.partial(
            _fused_kernel,
            layout=self._layout, num_stacks=L, hidden_size=H,
            input_size=self.input_size, output_size=self.output_size,
            p=self.p, preprocess=self.preprocess)

        vmem = pl.BlockSpec(memory_space=pltpu.MemorySpace.VMEM)
        smem = pl.BlockSpec(memory_space=pltpu.MemorySpace.SMEM)

        x_pad_new, state_next = pl.pallas_call(
            kernel,
            out_shape=(jax.ShapeDtypeStruct((B, Opad), jnp.float32),
                       jax.ShapeDtypeStruct((B, Spad), jnp.float32)),
            in_specs=[smem,   # lr scalar
                      vmem,   # activation slab (grads + x)
                      vmem,   # lane-dense state slab
                      vmem],  # packed weight slab
            out_specs=(vmem, vmem),
            # State input aliased to the state output (in-place update).
            input_output_aliases={2: 1},
        )(scale, act, state0, self.w_slab)

        return x_pad_new[:, :self.output_size], state_next

    # -------- pure-JAX reference for validation --------
    def reference(self, x, input_gradients, prev_state, i):
        B, H, L = self.batchsize, self.hidden_size, self.num_stacks
        pd = self.param_dtype
        if prev_state is None:
            h0 = jnp.zeros((L, B, H), jnp.float32)
            c0 = jnp.zeros((L, B, H), jnp.float32)
        elif isinstance(prev_state, tuple):
            h0, c0 = prev_state
        else:
            h0, c0 = self.unpack_state(prev_state)

        def mm(a, w):
            return jnp.dot(a.astype(pd), w.astype(pd),
                           preferred_element_type=jnp.float32)

        def qb(b):  # bias as the packed slab stores it (rounded to param_dtype)
            return b.astype(pd).astype(jnp.float32)

        g = input_gradients.astype(jnp.float32)
        if self.preprocess:
            log_part = jnp.clip(jnp.log(jnp.abs(g)) / float(self.p), -1.0, 1.0)
            sign_part = jnp.clip(math.exp(float(self.p)) * g, -1.0, 1.0)
            inp = jnp.concatenate([log_part, sign_part], axis=-1)
        else:
            inp = g
        hs, cs = [], []
        for layer in range(L):
            W_ih, W_hh, b = self._ref_weights[3 * layer:3 * layer + 3]
            gates = mm(inp, W_ih) + mm(h0[layer], W_hh) + qb(b)
            i_g = jax.nn.sigmoid(gates[:, 0 * H:1 * H])
            f_g = jax.nn.sigmoid(gates[:, 1 * H:2 * H])
            g_g = jnp.tanh(gates[:, 2 * H:3 * H])
            o_g = jax.nn.sigmoid(gates[:, 3 * H:4 * H])
            c_new = f_g * c0[layer] + i_g * g_g
            h_new = o_g * jnp.tanh(c_new)
            hs.append(h_new)
            cs.append(c_new)
            inp = h_new
        W_lin, b_lin = self._ref_weights[-2], self._ref_weights[-1]
        lr = self.learn_rate(5e-05, 0.96, i)
        update = (mm(inp, W_lin * float(self.output_scale))
                  + qb(b_lin * float(self.output_scale))) * lr
        return x + update, (jnp.stack(hs), jnp.stack(cs))


if __name__ == "__main__":
    # Small shapes consistent with the module's forward:
    #   x: (B, output_size), input_gradients: (B, input_size)
    input_size, output_size, hidden_size = 16, 16, 32
    num_stacks, batchsize = 2, 8
    step_i = 3

    model = LSTMBlackBoxOptimizeeLR(input_size, output_size, hidden_size,
                                    num_stacks, batchsize,
                                    preprocess=True, p=10, output_scale=1,
                                    key=jax.random.PRNGKey(0))  # bf16 weights by default

    key = jax.random.PRNGKey(0)
    kx, kg, kg2 = jax.random.split(key, 3)
    x = jax.random.normal(kx, (batchsize, output_size), jnp.float32)
    grads = 0.01 * jax.random.normal(kg, (batchsize, input_size), jnp.float32)
    grads2 = 0.01 * jax.random.normal(kg2, (batchsize, input_size), jnp.float32)

    # Step 1: cold (zero) state.
    x1, state1 = model(x, grads, None, step_i)
    jax.block_until_ready((x1, state1))

    x1_ref, (h1_ref, c1_ref) = model.reference(x, grads, None, step_i)
    h1, c1 = model.unpack_state(state1)
    tol = dict(rtol=2e-3, atol=1e-4)   # reference uses the same bf16 weights, so tight-ish
    assert jnp.allclose(x1, x1_ref, **tol), "x mismatch (step 1)"
    assert jnp.allclose(h1, h1_ref, **tol), "h mismatch (step 1)"
    assert jnp.allclose(c1, c1_ref, **tol), "c mismatch (step 1)"

    # Step 2: feed the packed lane-dense state straight back in (fast path).
    x2, state2 = model(x1, grads2, state1, step_i + 1)
    jax.block_until_ready((x2, state2))

    x2_ref, (h2_ref, c2_ref) = model.reference(x1, grads2, (h1, c1), step_i + 1)
    h2, c2 = model.unpack_state(state2)
    assert jnp.allclose(x2, x2_ref, **tol), "x mismatch (step 2)"
    assert jnp.allclose(h2, h2_ref, **tol), "h mismatch (step 2)"
    assert jnp.allclose(c2, c2_ref, **tol), "c mismatch (step 2)"

    print("KERNEL_OK")
</pallas_src>

<mosaic_0001>
module attributes {stable_mosaic.version = 11 : i64} {
  func.func @_fused_kernel(%arg0: memref<1xf32, #tpu.memory_space<smem>>, %arg1: memref<8x256xf32, #tpu.memory_space<vmem>>, %arg2: memref<8x128xf32, #tpu.memory_space<vmem>>, %arg3: memref<176x128xbf16, #tpu.memory_space<vmem>>, %arg4: memref<8x128xf32, #tpu.memory_space<vmem>>, %arg5: memref<8x128xf32, #tpu.memory_space<vmem>>) attributes {dimension_semantics = [], scalar_prefetch = 0 : i64, scratch_operands = 0 : i64, tpu.core_type = #tpu.core_type<tc>} {
    %c0 = arith.constant 0 : index
    %0 = memref.load %arg0[%c0] : memref<1xf32, #tpu.memory_space<smem>>
    %c0_0 = arith.constant 0 : index
    %c0_1 = arith.constant 0 : index
    %1 = vector.load %arg1[%c0_0, %c0_1] : memref<8x256xf32, #tpu.memory_space<vmem>>, vector<8x16xf32>
    %2 = math.absf %1 : vector<8x16xf32>
    %3 = math.log %2 : vector<8x16xf32>
    %cst = arith.constant 1.000000e+01 : f32
    %4 = vector.broadcast %cst : f32 to vector<8x16xf32>
    %5 = arith.divf %3, %4 : vector<8x16xf32>
    %cst_2 = arith.constant -1.000000e+00 : f32
    %cst_3 = arith.constant 1.000000e+00 : f32
    %6 = vector.broadcast %cst_2 : f32 to vector<8x16xf32>
    %7 = arith.maximumf %6, %5 : vector<8x16xf32>
    %8 = vector.broadcast %cst_3 : f32 to vector<8x16xf32>
    %9 = arith.minimumf %8, %7 : vector<8x16xf32>
    %cst_4 = arith.constant 22026.4648 : f32
    %10 = vector.broadcast %cst_4 : f32 to vector<8x16xf32>
    %11 = arith.mulf %10, %1 : vector<8x16xf32>
    %cst_5 = arith.constant -1.000000e+00 : f32
    %cst_6 = arith.constant 1.000000e+00 : f32
    %12 = vector.broadcast %cst_5 : f32 to vector<8x16xf32>
    %13 = arith.maximumf %12, %11 : vector<8x16xf32>
    %14 = vector.broadcast %cst_6 : f32 to vector<8x16xf32>
    %15 = arith.minimumf %14, %13 : vector<8x16xf32>
    %c160 = arith.constant 160 : index
    %c0_7 = arith.constant 0 : index
    %16 = vector.load %arg3[%c160, %c0_7] : memref<176x128xbf16, #tpu.memory_space<vmem>>, vector<16x128xbf16>
    %17 = arith.extf %16 : vector<16x128xbf16> to vector<16x128xf32>
    %c0_8 = arith.constant 0 : index
    %c0_9 = arith.constant 0 : index
    %18 = vector.load %arg2[%c0_8, %c0_9] : memref<8x128xf32, #tpu.memory_space<vmem>>, vector<8x32xf32>
    %c0_10 = arith.constant 0 : index
    %c64 = arith.constant 64 : index
    %19 = vector.load %arg2[%c0_10, %c64] : memref<8x128xf32, #tpu.memory_space<vmem>>, vector<8x32xf32>
    %c0_11 = arith.constant 0 : index
    %c0_12 = arith.constant 0 : index
    %20 = vector.load %arg3[%c0_11, %c0_12] : memref<176x128xbf16, #tpu.memory_space<vmem>>, vector<16x128xbf16>
    %c16 = arith.constant 16 : index
    %c0_13 = arith.constant 0 : index
    %21 = vector.load %arg3[%c16, %c0_13] : memref<176x128xbf16, #tpu.memory_space<vmem>>, vector<16x128xbf16>
    %22 = arith.truncf %9 : vector<8x16xf32> to vector<8x16xbf16>
    %cst_14 = arith.constant dense<0.000000e+00> : vector<8x128xf32>
    %23 = tpu.matmul %22, %20, %cst_14 {dimension_numbers = #tpu.dot_dimension_numbers<[1], [0], [0], [1], [0, 0, 1, 1], [], []>} : vector<8x16xbf16>, vector<16x128xbf16>, vector<8x128xf32> -> vector<8x128xf32>
    %24 = arith.truncf %15 : vector<8x16xf32> to vector<8x16xbf16>
    %cst_15 = arith.constant dense<0.000000e+00> : vector<8x128xf32>
    %25 = tpu.matmul %24, %21, %cst_15 {dimension_numbers = #tpu.dot_dimension_numbers<[1], [0], [0], [1], [0, 0, 1, 1], [], []>} : vector<8x16xbf16>, vector<16x128xbf16>, vector<8x128xf32> -> vector<8x128xf32>
    %26 = arith.addf %23, %25 : vector<8x128xf32>
    %c32 = arith.constant 32 : index
    %c0_16 = arith.constant 0 : index
    %27 = vector.load %arg3[%c32, %c0_16] : memref<176x128xbf16, #tpu.memory_space<vmem>>, vector<32x128xbf16>
    %28 = arith.truncf %18 : vector<8x32xf32> to vector<8x32xbf16>
    %cst_17 = arith.constant dense<0.000000e+00> : vector<8x128xf32>
    %29 = tpu.matmul %28, %27, %cst_17 {dimension_numbers = #tpu.dot_dimension_numbers<[1], [0], [0], [1], [0, 0, 1, 1], [], []>} : vector<8x32xbf16>, vector<32x128xbf16>, vector<8x128xf32> -> vector<8x128xf32>
    %30 = arith.addf %26, %29 : vector<8x128xf32>
    %31 = vector.extract_strided_slice %17 {offsets = [0, 0], sizes = [1, 128], strides = [1, 1]} : vector<16x128xf32> to vector<1x128xf32>
    %32 = vector.broadcast %31 : vector<1x128xf32> to vector<8x128xf32>
    %33 = arith.addf %30, %32 : vector<8x128xf32>
    %34 = arith.negf %33 : vector<8x128xf32>
    %35 = math.exp %34 : vector<8x128xf32>
    %cst_18 = arith.constant 1.000000e+00 : f32
    %36 = vector.broadcast %cst_18 : f32 to vector<8x128xf32>
    %37 = arith.addf %36, %35 : vector<8x128xf32>
    %38 = arith.divf %36, %37 : vector<8x128xf32>
    %39 = math.tanh %33 : vector<8x128xf32>
    %40 = vector.extract_strided_slice %38 {offsets = [0, 0], sizes = [8, 32], strides = [1, 1]} : vector<8x128xf32> to vector<8x32xf32>
    %41 = vector.extract_strided_slice %38 {offsets = [0, 32], sizes = [8, 32], strides = [1, 1]} : vector<8x128xf32> to vector<8x32xf32>
    %42 = vector.extract_strided_slice %38 {offsets = [0, 96], sizes = [8, 32], strides = [1, 1]} : vector<8x128xf32> to vector<8x32xf32>
    %43 = vector.extract_strided_slice %39 {offsets = [0, 64], sizes = [8, 32], strides = [1, 1]} : vector<8x128xf32> to vector<8x32xf32>
    %44 = arith.mulf %41, %19 : vector<8x32xf32>
    %45 = arith.mulf %40, %43 : vector<8x32xf32>
    %46 = arith.addf %44, %45 : vector<8x32xf32>
    %47 = math.tanh %46 : vector<8x32xf32>
    %48 = arith.mulf %42, %47 : vector<8x32xf32>
    %c0_19 = arith.constant 0 : index
    %c0_20 = arith.constant 0 : index
    %49 = vector.load %arg5[%c0_19, %c0_20] : memref<8x128xf32, #tpu.memory_space<vmem>>, vector<8x32xf32>
    tpu.vector_store %arg5[%c0_19, %c0_20], %48 {strides = array<i32>} : memref<8x128xf32, #tpu.memory_space<vmem>>, vector<8x32xf32>,
    %c0_21 = arith.constant 0 : index
    %c64_22 = arith.constant 64 : index
    %50 = vector.load %arg5[%c0_21, %c64_22] : memref<8x128xf32, #tpu.memory_space<vmem>>, vector<8x32xf32>
    tpu.vector_store %arg5[%c0_21, %c64_22], %46 {strides = array<i32>} : memref<8x128xf32, #tpu.memory_space<vmem>>, vector<8x32xf32>,
    %c0_23 = arith.constant 0 : index
    %c32_24 = arith.constant 32 : index
    %51 = vector.load %arg2[%c0_23, %c32_24] : memref<8x128xf32, #tpu.memory_space<vmem>>, vector<8x32xf32>
    %c0_25 = arith.constant 0 : index
    %c96 = arith.constant 96 : index
    %52 = vector.load %arg2[%c0_25, %c96] : memref<8x128xf32, #tpu.memory_space<vmem>>, vector<8x32xf32>
    %c64_26 = arith.constant 64 : index
    %c0_27 = arith.constant 0 : index
    %53 = vector.load %arg3[%c64_26, %c0_27] : memref<176x128xbf16, #tpu.memory_space<vmem>>, vector<32x128xbf16>
    %54 = arith.truncf %48 : vector<8x32xf32> to vector<8x32xbf16>
    %cst_28 = arith.constant dense<0.000000e+00> : vector<8x128xf32>
    %55 = tpu.matmul %54, %53, %cst_28 {dimension_numbers = #tpu.dot_dimension_numbers<[1], [0], [0], [1], [0, 0, 1, 1], [], []>} : vector<8x32xbf16>, vector<32x128xbf16>, vector<8x128xf32> -> vector<8x128xf32>
    %c96_29 = arith.constant 96 : index
    %c0_30 = arith.constant 0 : index
    %56 = vector.load %arg3[%c96_29, %c0_30] : memref<176x128xbf16, #tpu.memory_space<vmem>>, vector<32x128xbf16>
    %57 = arith.truncf %51 : vector<8x32xf32> to vector<8x32xbf16>
    %cst_31 = arith.constant dense<0.000000e+00> : vector<8x128xf32>
    %58 = tpu.matmul %57, %56, %cst_31 {dimension_numbers = #tpu.dot_dimension_numbers<[1], [0], [0], [1], [0, 0, 1, 1], [], []>} : vector<8x32xbf16>, vector<32x128xbf16>, vector<8x128xf32> -> vector<8x128xf32>
    %59 = arith.addf %55, %58 : vector<8x128xf32>
    %60 = vector.extract_strided_slice %17 {offsets = [1, 0], sizes = [1, 128], strides = [1, 1]} : vector<16x128xf32> to vector<1x128xf32>
    %61 = vector.broadcast %60 : vector<1x128xf32> to vector<8x128xf32>
    %62 = arith.addf %59, %61 : vector<8x128xf32>
    %63 = arith.negf %62 : vector<8x128xf32>
    %64 = math.exp %63 : vector<8x128xf32>
    %cst_32 = arith.constant 1.000000e+00 : f32
    %65 = vector.broadcast %cst_32 : f32 to vector<8x128xf32>
    %66 = arith.addf %65, %64 : vector<8x128xf32>
    %67 = arith.divf %65, %66 : vector<8x128xf32>
    %68 = math.tanh %62 : vector<8x128xf32>
    %69 = vector.extract_strided_slice %67 {offsets = [0, 0], sizes = [8, 32], strides = [1, 1]} : vector<8x128xf32> to vector<8x32xf32>
    %70 = vector.extract_strided_slice %67 {offsets = [0, 32], sizes = [8, 32], strides = [1, 1]} : vector<8x128xf32> to vector<8x32xf32>
    %71 = vector.extract_strided_slice %67 {offsets = [0, 96], sizes = [8, 32], strides = [1, 1]} : vector<8x128xf32> to vector<8x32xf32>
    %72 = vector.extract_strided_slice %68 {offsets = [0, 64], sizes = [8, 32], strides = [1, 1]} : vector<8x128xf32> to vector<8x32xf32>
    %73 = arith.mulf %70, %52 : vector<8x32xf32>
    %74 = arith.mulf %69, %72 : vector<8x32xf32>
    %75 = arith.addf %73, %74 : vector<8x32xf32>
    %76 = math.tanh %75 : vector<8x32xf32>
    %77 = arith.mulf %71, %76 : vector<8x32xf32>
    %c0_33 = arith.constant 0 : index
    %c32_34 = arith.constant 32 : index
    %78 = vector.load %arg5[%c0_33, %c32_34] : memref<8x128xf32, #tpu.memory_space<vmem>>, vector<8x32xf32>
    tpu.vector_store %arg5[%c0_33, %c32_34], %77 {strides = array<i32>} : memref<8x128xf32, #tpu.memory_space<vmem>>, vector<8x32xf32>,
    %c0_35 = arith.constant 0 : index
    %c96_36 = arith.constant 96 : index
    %79 = vector.load %arg5[%c0_35, %c96_36] : memref<8x128xf32, #tpu.memory_space<vmem>>, vector<8x32xf32>
    tpu.vector_store %arg5[%c0_35, %c96_36], %75 {strides = array<i32>} : memref<8x128xf32, #tpu.memory_space<vmem>>, vector<8x32xf32>,
    %c128 = arith.constant 128 : index
    %c0_37 = arith.constant 0 : index
    %80 = vector.load %arg3[%c128, %c0_37] : memref<176x128xbf16, #tpu.memory_space<vmem>>, vector<32x128xbf16>
    %81 = arith.truncf %77 : vector<8x32xf32> to vector<8x32xbf16>
    %cst_38 = arith.constant dense<0.000000e+00> : vector<8x128xf32>
    %82 = tpu.matmul %81, %80, %cst_38 {dimension_numbers = #tpu.dot_dimension_numbers<[1], [0], [0], [1], [0, 0, 1, 1], [], []>} : vector<8x32xbf16>, vector<32x128xbf16>, vector<8x128xf32> -> vector<8x128xf32>
    %83 = vector.extract_strided_slice %17 {offsets = [2, 0], sizes = [1, 128], strides = [1, 1]} : vector<16x128xf32> to vector<1x128xf32>
    %84 = vector.broadcast %83 : vector<1x128xf32> to vector<8x128xf32>
    %85 = arith.addf %82, %84 : vector<8x128xf32>
    %86 = vector.broadcast %0 : f32 to vector<8x128xf32>
    %87 = arith.mulf %85, %86 : vector<8x128xf32>
    %c0_39 = arith.constant 0 : index
    %c128_40 = arith.constant 128 : index
    %88 = vector.load %arg1[%c0_39, %c128_40] : memref<8x256xf32, #tpu.memory_space<vmem>>, vector<8x128xf32>
    %89 = arith.addf %88, %87 : vector<8x128xf32>
    %c0_41 = arith.constant 0 : index
    %c0_42 = arith.constant 0 : index
    %90 = vector.load %arg4[%c0_41, %c0_42] : memref<8x128xf32, #tpu.memory_space<vmem>>, vector<8x128xf32>
    tpu.vector_store %arg4[%c0_41, %c0_42], %89 {strides = array<i32>} : memref<8x128xf32, #tpu.memory_space<vmem>>, vector<8x128xf32>,
    return
  }
}

</mosaic_0001>

<llo_original>
// kernel: tpu_custom_call.1
$region0: #{tpu_custom_call.1}
  #allocation0 [shape = 'u32[]', space=smem, size = 0x4, offset = 0x4, fixed_abs, tag = 'smem constant byte address 0x4 - core index']
  #allocation1 [shape = 'u32[144,128]{1,0:T(1,128)}', space=vmem, size = 0x12000, scoped, tag = 'internal scratch']
  #allocation2 [shape = 'f32[1]{0:T(128)S(6)}', space=smem, size = 0x200, scoped, tag = 'scoped memory for tpu_custom_call.1']
  %s0 = inlined_call_operand.<no memory space> [shape: f32[1], index: 0, kind: input, shape index: {}]
  %s1 = inlined_call_operand.vmem [shape: f32[8,256], index: 1, kind: input, shape index: {}]
  %s2 = inlined_call_operand.hbm [shape: f32[8,128], index: 2, kind: input, shape index: {}, may-alias: {2,5}]
  %s3 = inlined_call_operand.hbm [shape: bf16[176,128], index: 3, kind: input, shape index: {}]
  %s4 = inlined_call_operand.hbm [shape: f32[8,128], index: 4, kind: output, shape index: {0}]
  %s5 = inlined_call_operand.hbm [shape: f32[8,128], index: 5, kind: output, shape index: {1}, may-alias: {2,5}]
  %6 = xla_tuple %s4, %s5
  %s7 = sld [smem:[#allocation0]]
  $region42: #{tpu_custom_call.1} parent=0
    _
  %s9 = ssub.s32 1, %s7
  %s10 = scalar_select 0, %s9, %s7
  %11 = sst [smem:[#allocation2]] %s0
  $region1: #{tpu_custom_call.1} parent=0
    #allocation3 [shape = 'u8[4096]{0}', space=vmem, size = 0x1000, scoped, tag = 'input window, operand 2, single buffered']
    #allocation4 [shape = 's32[1]{0}', space=sflag, size = 0x4, scoped, tag = 'scoped memory for tpu_custom_call.1']
    #allocation5 [shape = 's32[1]{0}', space=sflag, size = 0x4, scoped, tag = 'scoped memory for tpu_custom_call.1']
    #allocation6 [shape = 'u8[45056]{0}', space=vmem, size = 0xb000, scoped, tag = 'input window, operand 3, single buffered']
    #allocation7 [shape = 's32[1]{0}', space=sflag, size = 0x4, scoped, tag = 'scoped memory for tpu_custom_call.1']
    #allocation8 [shape = 'u8[4096]{0}', space=vmem, size = 0x1000, scoped, tag = 'output window, operand 0, single buffered']
    #allocation9 [shape = 'u8[4096]{0}', space=vmem, size = 0x1000, scoped, tag = 'output window, operand 1, single buffered']
    #allocation10 [shape = 's32[1]{0}', space=sflag, size = 0x4, scoped, tag = 'scoped memory for tpu_custom_call.1']
    %12 = vsyncpa [#allocation4], 0
    %13 = vsyncpa [#allocation7], 0
    %14 = vsyncpa [#allocation5], 0
    %15 = vsyncpa [#allocation10], 0
    // Predicated region
    $region2: #{tpu_custom_call.1} parent=1 // pred_check
      _
    $region3: #{tpu_custom_call.1} parent=1 // pred_check_branch
      %17 = sbr.rel (0) target = $region5
    $region4: #{tpu_custom_call.1} parent=1 // pred_region
      _
    $region5: #{tpu_custom_call.1} parent=1 // pred_fallthru
      _
    // Predicated region
    $region6: #{tpu_custom_call.1} parent=1 // pred_check
      _
    $region7: #{tpu_custom_call.1} parent=1 // pred_check_branch
      %19 = sbr.rel (0) target = $region9
    $region8: #{tpu_custom_call.1} parent=1 // pred_region
      _
    $region9: #{tpu_custom_call.1} parent=1 // pred_fallthru
      _
    // Predicated region
    $region10: #{tpu_custom_call.1} parent=1 // pred_check
      _
    $region11: #{tpu_custom_call.1} parent=1 // pred_check_branch
      %21 = sbr.rel (0) target = $region13
    $region12: #{tpu_custom_call.1} parent=1 // pred_region
      %s23 = ssub.s32 128, 128
      %24 = vsyncadd [#allocation4], %s23
      %s26 = sshll.u32 [#allocation3], 4
      %s27 = int_to_ptr.vmem [resolvable:$true] %s26
      %29 = dma.hbm_to_vmem [thread:$0]  %s2, 128, %s27, [#allocation4]
    $region13: #{tpu_custom_call.1} parent=1 // pred_fallthru
      _
    // Predicated region
    $region14: #{tpu_custom_call.1} parent=1 // pred_check
      _
    $region15: #{tpu_custom_call.1} parent=1 // pred_check_branch
      %31 = sbr.rel (0) target = $region17
    $region16: #{tpu_custom_call.1} parent=1 // pred_region
      %s33 = ssub.s32 1408, 1408
      %34 = vsyncadd [#allocation7], %s33
      %s35 = sshll.u32 [#allocation6], 4
      %s36 = int_to_ptr.vmem [resolvable:$true] %s35
      %41 = dma.hbm_to_vmem [thread:$0]  %s3, 1408, %s36, [#allocation7], 64, 64, 4
    $region17: #{tpu_custom_call.1} parent=1 // pred_fallthru
      _
    // Predicated region
    $region18: #{tpu_custom_call.1} parent=1 // pred_check
      _
    $region19: #{tpu_custom_call.1} parent=1 // pred_check_branch
      %43 = sbr.rel (0) target = $region21
    $region20: #{tpu_custom_call.1} parent=1 // pred_region
      %44 = dma.done [#allocation4], 128
    $region21: #{tpu_custom_call.1} parent=1 // pred_fallthru
      _
    // Predicated region
    $region22: #{tpu_custom_call.1} parent=1 // pred_check
      _
    $region23: #{tpu_custom_call.1} parent=1 // pred_check_branch
      %46 = sbr.rel (0) target = $region25
    $region24: #{tpu_custom_call.1} parent=1 // pred_region
      %47 = dma.done [#allocation7], 1408
    $region25: #{tpu_custom_call.1} parent=1 // pred_fallthru
      _
    %s49 = sld [smem:[#allocation2]]
    %v50 = vld [vmem:[%s1] sm:$0xff]
    %v51 = vand.u32 2147483647, %v50
    %v52 = vlog2.pop %v51
    %v53 = vmul.f32 %v52, 0.6931472
    %v54 = vrcp.pop 10.0
    %v55 = vmul.f32 %v53, %v54
    %v56 = vmax.f32 %v55, -1.0
    %v57 = vmin.f32 %v56, 1.0
    %v58 = vmul.f32 %v50, 22026.465
    %v59 = vmax.f32 %v58, -1.0
    %v60 = vmin.f32 %v59, 1.0
    %v61 = vld [vmem:[#allocation6 + $0x50] sm:$0xf]
    %v62 = vunpack.c.l.bf16 %v61
    %v63 = vld [vmem:[#allocation3] sm:$0xff]
    %v64 = vld [vmem:[#allocation6] sm:$0xf]
    %v65 = vld [vmem:[#allocation6 + $0x4] sm:$0xf]
    %v66 = vld [vmem:[#allocation6 + $0x8] sm:$0xf]
    %v67 = vld [vmem:[#allocation6 + $0xc] sm:$0xf]
    %v68 = vpack.c.bf16 %v57, %v57
    %v69 = vpack.c.bf16 %v60, %v60
    %v72 = vunpack.c.l.b16 %v66
    %v73 = vunpack.c.l.b16 %v67
    %v74 = vpack.c.b16 %v73, %v72
    %vm76 = vcmask 130048
    %v78 = vsel %vm76, %v69, 0
    %80 = vmatprep.subr.bf16.mxu0 0
    %81 = vmatpush1.bf16.msra.mxu0 0
    %82 = vmatprep.subr.bf16.mxu0 0
    %83 = vmatpush1.bf16.msra.mxu0 0
    %84 = vmatprep.subr.bf16.mxu0 0
    %85 = vmatpush1.bf16.msra.mxu0 0
    %86 = vmatprep.subr.bf16.mxu0 0
    %87 = vmatpush1.bf16.msra.mxu0 0
    %88 = vmatprep.subr.bf16.mxu0 0
    %89 = vmatpush1.bf16.msra.mxu0 0
    %90 = vmatprep.subr.bf16.mxu0 0
    %91 = vmatpush1.bf16.msra.mxu0 0
    %92 = vmatprep.subr.bf16.mxu0 0
    %93 = vmatpush1.bf16.msra.mxu0 0
    %94 = vmatprep.subr.bf16.mxu0 0
    %95 = vmatpush1.bf16.msra.mxu0 %v74
    %96 = vmatprep.subr.bf16.mxu0 0
    %97 = vmatpush2.bf16.msra.mxu0 0
    %98 = vmatprep.subr.bf16.mxu0 0
    %99 = vmatpush2.bf16.msra.mxu0 0
    %100 = vmatprep.subr.bf16.mxu0 0
    %101 = vmatpush2.bf16.msra.mxu0 0
    %102 = vmatprep.subr.bf16.mxu0 0
    %103 = vmatpush2.bf16.msra.mxu0 0
    %104 = vmatprep.subr.bf16.mxu0 0
    %105 = vmatpush2.bf16.msra.mxu0 0
    %106 = vmatprep.subr.bf16.mxu0 0
    %107 = vmatpush2.bf16.msra.mxu0 0
    %108 = vmatprep.subr.bf16.mxu0 0
    %109 = vmatpush2.bf16.msra.mxu0 0
    %110 = vmatprep.subr.bf16.mxu0 0
    %111 = vmatpush2.bf16.msra.mxu0 0
    %112 = vmatprep.mubr.bf16.mxu0 0
    %113 = vmatmul.mubr.bf16.gmra.mxu0 %v78
    %v114 = vpop.f32.mrf.mxu0
    %v115 = vadd.f32 0.0, %v114
    %v116 = vpop.f32.mrf.mxu0
    %v117 = vpop.f32.mrf.mxu0
    %v118 = vpop.f32.mrf.mxu0
    %119 = vdwg.mxu0
    %v122 = vunpack.c.l.b16 %v64
    %v123 = vunpack.c.l.b16 %v65
    %v124 = vpack.c.b16 %v123, %v122
    %v127 = vsel %vm76, %v68, 0
    %129 = vmatprep.subr.bf16.mxu0 0
    %130 = vmatpush1.bf16.msra.mxu0 0
    %131 = vmatprep.subr.bf16.mxu0 0
    %132 = vmatpush1.bf16.msra.mxu0 0
    %133 = vmatprep.subr.bf16.mxu0 0
    %134 = vmatpush1.bf16.msra.mxu0 0
    %135 = vmatprep.subr.bf16.mxu0 0
    %136 = vmatpush1.bf16.msra.mxu0 0
    %137 = vmatprep.subr.bf16.mxu0 0
    %138 = vmatpush1.bf16.msra.mxu0 0
    %139 = vmatprep.subr.bf16.mxu0 0
    %140 = vmatpush1.bf16.msra.mxu0 0
    %141 = vmatprep.subr.bf16.mxu0 0
    %142 = vmatpush1.bf16.msra.mxu0 0
    %143 = vmatprep.subr.bf16.mxu0 0
    %144 = vmatpush1.bf16.msra.mxu0 %v124
    %145 = vmatprep.subr.bf16.mxu0 0
    %146 = vmatpush2.bf16.msra.mxu0 0
    %147 = vmatprep.subr.bf16.mxu0 0
    %148 = vmatpush2.bf16.msra.mxu0 0
    %149 = vmatprep.subr.bf16.mxu0 0
    %150 = vmatpush2.bf16.msra.mxu0 0
    %151 = vmatprep.subr.bf16.mxu0 0
    %152 = vmatpush2.bf16.msra.mxu0 0
    %153 = vmatprep.subr.bf16.mxu0 0
    %154 = vmatpush2.bf16.msra.mxu0 0
    %155 = vmatprep.subr.bf16.mxu0 0
    %156 = vmatpush2.bf16.msra.mxu0 0
    %157 = vmatprep.subr.bf16.mxu0 0
    %158 = vmatpush2.bf16.msra.mxu0 0
    %159 = vmatprep.subr.bf16.mxu0 0
    %160 = vmatpush2.bf16.msra.mxu0 0
    %161 = vmatprep.mubr.bf16.mxu0 0
    %162 = vmatmul.mubr.bf16.gmra.mxu0 %v127
    %v163 = vpop.f32.mrf.mxu0
    %v164 = vadd.f32 %v115, %v163
    %v165 = vpop.f32.mrf.mxu0
    %v166 = vpop.f32.mrf.mxu0
    %v167 = vpop.f32.mrf.mxu0
    %168 = vdwg.mxu0
    %v169 = vld [vmem:[#allocation6 + $0x10] sm:$0xf]
    %v170 = vld [vmem:[#allocation6 + $0x14] sm:$0xf]
    %v171 = vld [vmem:[#allocation6 + $0x18] sm:$0xf]
    %v172 = vld [vmem:[#allocation6 + $0x1c] sm:$0xf]
    %v173 = vpack.c.bf16 %v63, %v63
    %v178 = vunpack.c.l.b16 %v169
    %v179 = vunpack.c.l.b16 %v170
    %v180 = vunpack.c.l.b16 %v171
    %v181 = vunpack.c.l.b16 %v172
    %v182 = vpack.c.b16 %v179, %v178
    %v183 = vpack.c.b16 %v181, %v180
    %vm186 = vcmask 261120
    %v188 = vsel %vm186, %v173, 0
    %190 = vmatprep.subr.bf16.mxu0 0
    %191 = vmatpush1.bf16.msra.mxu0 0
    %192 = vmatprep.subr.bf16.mxu0 0
    %193 = vmatpush1.bf16.msra.mxu0 0
    %194 = vmatprep.subr.bf16.mxu0 0
    %195 = vmatpush1.bf16.msra.mxu0 0
    %196 = vmatprep.subr.bf16.mxu0 0
    %197 = vmatpush1.bf16.msra.mxu0 0
    %198 = vmatprep.subr.bf16.mxu0 0
    %199 = vmatpush1.bf16.msra.mxu0 0
    %200 = vmatprep.subr.bf16.mxu0 0
    %201 = vmatpush1.bf16.msra.mxu0 0
    %202 = vmatprep.subr.bf16.mxu0 0
    %203 = vmatpush1.bf16.msra.mxu0 %v183
    %204 = vmatprep.subr.bf16.mxu0 0
    %205 = vmatpush1.bf16.msra.mxu0 %v182
    %206 = vmatprep.subr.bf16.mxu0 0
    %207 = vmatpush2.bf16.msra.mxu0 0
    %208 = vmatprep.subr.bf16.mxu0 0
    %209 = vmatpush2.bf16.msra.mxu0 0
    %210 = vmatprep.subr.bf16.mxu0 0
    %211 = vmatpush2.bf16.msra.mxu0 0
    %212 = vmatprep.subr.bf16.mxu0 0
    %213 = vmatpush2.bf16.msra.mxu0 0
    %214 = vmatprep.subr.bf16.mxu0 0
    %215 = vmatpush2.bf16.msra.mxu0 0
    %216 = vmatprep.subr.bf16.mxu0 0
    %217 = vmatpush2.bf16.msra.mxu0 0
    %218 = vmatprep.subr.bf16.mxu0 0
    %219 = vmatpush2.bf16.msra.mxu0 0
    %220 = vmatprep.subr.bf16.mxu0 0
    %221 = vmatpush2.bf16.msra.mxu0 0
    %222 = vmatprep.mubr.bf16.mxu0 0
    %223 = vmatmul.mubr.bf16.gmra.mxu0 %v188
    %v224 = vpop.f32.mrf.mxu0
    %v225 = vadd.f32 0.0, %v224
    %v226 = vpop.f32.mrf.mxu0
    %v227 = vpop.f32.mrf.mxu0
    %v228 = vpop.f32.mrf.mxu0
    %229 = vdwg.mxu0
    %v230 = vadd.f32 %v164, %v225
    %v231 = vlaneseq
    %v232 = vshrl.u32 %v231, 7
    %v233 = vsub.s32 0, %v232
    %v234 = vrot.slane %v62, %v233
    %v235 = vadd.f32 %v230, %v234
    %v236 = vxor.u32 %v235, 2147483648
    %v237 = vmul.f32 %v236, 1.442695
    %v238 = vpow.pop %v237
    %v239 = vadd.f32 %v238, 1.0
    %v240 = vrcp.pop %v239
    %v241 = vmul.f32 1.0, %v240
    %v242 = vtanh.pop %v235
    %244 = vrot.lane.b32.xlu0 %v63, 96
    %v245 = vpop.permute.xlu0 %244
    %v247 = vmul.f32 %v241, %v245
    %249 = vrot.lane.b32.xlu0 %v242, 64
    %v250 = vpop.permute.xlu0 %249
    %v252 = vmul.f32 %v241, %v250
    %254 = vrot.lane.b32.xlu0 %v252, 32
    %v255 = vpop.permute.xlu0 %254
    %v257 = vadd.f32 %v247, %v255
    %v258 = vtanh.pop %v257
    %260 = vrot.lane.b32.xlu0 %v258, 64
    %v261 = vpop.permute.xlu0 %260
    %v263 = vmul.f32 %v241, %v261
    %265 = vrot.lane.b32.xlu0 %v263, 32
    %v266 = vpop.permute.xlu0 %265
    %268 = vst.msk [vmem:[#allocation9] sm:$0xff] %vm186, %v266
    %270 = vrot.lane.b32.xlu0 %v257, 32
    %v271 = vpop.permute.xlu0 %270
    %vm273 = vcmask 785920
    %274 = vst.msk [vmem:[#allocation9] sm:$0xff] %vm273, %v271
    %v275 = vld [vmem:[#allocation3] sm:$0xff]
    %v276 = vld [vmem:[#allocation6 + $0x20] sm:$0xf]
    %v277 = vld [vmem:[#allocation6 + $0x24] sm:$0xf]
    %v278 = vld [vmem:[#allocation6 + $0x28] sm:$0xf]
    %v279 = vld [vmem:[#allocation6 + $0x2c] sm:$0xf]
    %v280 = vpack.c.bf16 %v263, %v263
    %v281 = vld [vmem:[#allocation6 + $0x30] sm:$0xf]
    %v282 = vld [vmem:[#allocation6 + $0x34] sm:$0xf]
    %v283 = vld [vmem:[#allocation6 + $0x38] sm:$0xf]
    %v284 = vld [vmem:[#allocation6 + $0x3c] sm:$0xf]
    %v285 = vpack.c.bf16 %v275, %v275
    %287 = vrot.lane.b32.xlu0 %v285, 96
    %v288 = vpop.permute.xlu0 %287
    %v293 = vunpack.c.l.b16 %v281
    %v294 = vunpack.c.l.b16 %v282
    %v295 = vunpack.c.l.b16 %v283
    %v296 = vunpack.c.l.b16 %v284
    %v297 = vpack.c.b16 %v294, %v293
    %v298 = vpack.c.b16 %v296, %v295
    %v302 = vsel %vm186, %v288, 0
    %304 = vmatprep.subr.bf16.mxu0 0
    %305 = vmatpush1.bf16.msra.mxu0 0
    %306 = vmatprep.subr.bf16.mxu0 0
    %307 = vmatpush1.bf16.msra.mxu0 0
    %308 = vmatprep.subr.bf16.mxu0 0
    %309 = vmatpush1.bf16.msra.mxu0 0
    %310 = vmatprep.subr.bf16.mxu0 0
    %311 = vmatpush1.bf16.msra.mxu0 0
    %312 = vmatprep.subr.bf16.mxu0 0
    %313 = vmatpush1.bf16.msra.mxu0 0
    %314 = vmatprep.subr.bf16.mxu0 0
    %315 = vmatpush1.bf16.msra.mxu0 0
    %316 = vmatprep.subr.bf16.mxu0 0
    %317 = vmatpush1.bf16.msra.mxu0 %v298
    %318 = vmatprep.subr.bf16.mxu0 0
    %319 = vmatpush1.bf16.msra.mxu0 %v297
    %320 = vmatprep.subr.bf16.mxu0 0
    %321 = vmatpush2.bf16.msra.mxu0 0
    %322 = vmatprep.subr.bf16.mxu0 0
    %323 = vmatpush2.bf16.msra.mxu0 0
    %324 = vmatprep.subr.bf16.mxu0 0
    %325 = vmatpush2.bf16.msra.mxu0 0
    %326 = vmatprep.subr.bf16.mxu0 0
    %327 = vmatpush2.bf16.msra.mxu0 0
    %328 = vmatprep.subr.bf16.mxu0 0
    %329 = vmatpush2.bf16.msra.mxu0 0
    %330 = vmatprep.subr.bf16.mxu0 0
    %331 = vmatpush2.bf16.msra.mxu0 0
    %332 = vmatprep.subr.bf16.mxu0 0
    %333 = vmatpush2.bf16.msra.mxu0 0
    %334 = vmatprep.subr.bf16.mxu0 0
    %335 = vmatpush2.bf16.msra.mxu0 0
    %336 = vmatprep.mubr.bf16.mxu0 0
    %337 = vmatmul.mubr.bf16.gmra.mxu0 %v302
    %v338 = vpop.f32.mrf.mxu0
    %v339 = vadd.f32 0.0, %v338
    %v340 = vpop.f32.mrf.mxu0
    %v341 = vpop.f32.mrf.mxu0
    %v342 = vpop.f32.mrf.mxu0
    %343 = vdwg.mxu0
    %345 = vrot.lane.b32.xlu0 %v280, 32
    %v346 = vpop.permute.xlu0 %345
    %v351 = vunpack.c.l.b16 %v276
    %v352 = vunpack.c.l.b16 %v277
    %v353 = vunpack.c.l.b16 %v278
    %v354 = vunpack.c.l.b16 %v279
    %v355 = vpack.c.b16 %v352, %v351
    %v356 = vpack.c.b16 %v354, %v353
    %v360 = vsel %vm186, %v346, 0
    %362 = vmatprep.subr.bf16.mxu0 0
    %363 = vmatpush1.bf16.msra.mxu0 0
    %364 = vmatprep.subr.bf16.mxu0 0
    %365 = vmatpush1.bf16.msra.mxu0 0
    %366 = vmatprep.subr.bf16.mxu0 0
    %367 = vmatpush1.bf16.msra.mxu0 0
    %368 = vmatprep.subr.bf16.mxu0 0
    %369 = vmatpush1.bf16.msra.mxu0 0
    %370 = vmatprep.subr.bf16.mxu0 0
    %371 = vmatpush1.bf16.msra.mxu0 0
    %372 = vmatprep.subr.bf16.mxu0 0
    %373 = vmatpush1.bf16.msra.mxu0 0
    %374 = vmatprep.subr.bf16.mxu0 0
    %375 = vmatpush1.bf16.msra.mxu0 %v356
    %376 = vmatprep.subr.bf16.mxu0 0
    %377 = vmatpush1.bf16.msra.mxu0 %v355
    %378 = vmatprep.subr.bf16.mxu0 0
    %379 = vmatpush2.bf16.msra.mxu0 0
    %380 = vmatprep.subr.bf16.mxu0 0
    %381 = vmatpush2.bf16.msra.mxu0 0
    %382 = vmatprep.subr.bf16.mxu0 0
    %383 = vmatpush2.bf16.msra.mxu0 0
    %384 = vmatprep.subr.bf16.mxu0 0
    %385 = vmatpush2.bf16.msra.mxu0 0
    %386 = vmatprep.subr.bf16.mxu0 0
    %387 = vmatpush2.bf16.msra.mxu0 0
    %388 = vmatprep.subr.bf16.mxu0 0
    %389 = vmatpush2.bf16.msra.mxu0 0
    %390 = vmatprep.subr.bf16.mxu0 0
    %391 = vmatpush2.bf16.msra.mxu0 0
    %392 = vmatprep.subr.bf16.mxu0 0
    %393 = vmatpush2.bf16.msra.mxu0 0
    %394 = vmatprep.mubr.bf16.mxu0 0
    %395 = vmatmul.mubr.bf16.gmra.mxu0 %v360
    %v396 = vpop.f32.mrf.mxu0
    %v397 = vadd.f32 %v339, %v396
    %v398 = vpop.f32.mrf.mxu0
    %v399 = vpop.f32.mrf.mxu0
    %v400 = vpop.f32.mrf.mxu0
    %401 = vdwg.mxu0
    %v402 = vlaneseq
    %v403 = vshrl.u32 %v402, 7
    %v404 = vsub.s32 1, %v403
    %v405 = vrot.slane %v62, %v404
    %v406 = vadd.f32 %v397, %v405
    %v407 = vxor.u32 %v406, 2147483648
    %v408 = vmul.f32 %v407, 1.442695
    %v409 = vpow.pop %v408
    %v410 = vadd.f32 %v409, 1.0
    %v411 = vrcp.pop %v410
    %v412 = vmul.f32 1.0, %v411
    %v413 = vtanh.pop %v406
    %415 = vrot.lane.b32.xlu0 %v275, 64
    %v416 = vpop.permute.xlu0 %415
    %v418 = vmul.f32 %v412, %v416
    %420 = vrot.lane.b32.xlu0 %v413, 64
    %v421 = vpop.permute.xlu0 %420
    %v423 = vmul.f32 %v412, %v421
    %425 = vrot.lane.b32.xlu0 %v423, 32
    %v426 = vpop.permute.xlu0 %425
    %v428 = vadd.f32 %v418, %v426
    %v429 = vtanh.pop %v428
    %431 = vrot.lane.b32.xlu0 %v429, 64
    %v432 = vpop.permute.xlu0 %431
    %v434 = vmul.f32 %v412, %v432
    %436 = vrot.lane.b32.xlu0 %v434, 64
    %v437 = vpop.permute.xlu0 %436
    %vm439 = vcmask 523520
    %440 = vst.msk [vmem:[#allocation9] sm:$0xff] %vm439, %v437
    %442 = vrot.lane.b32.xlu0 %v428, 64
    %v443 = vpop.permute.xlu0 %442
    %vm445 = vcmask 1048320
    %446 = vst.msk [vmem:[#allocation9] sm:$0xff] %vm445, %v443
    %v447 = vld [vmem:[#allocation6 + $0x40] sm:$0xf]
    %v448 = vld [vmem:[#allocation6 + $0x44] sm:$0xf]
    %v449 = vld [vmem:[#allocation6 + $0x48] sm:$0xf]
    %v450 = vld [vmem:[#allocation6 + $0x4c] sm:$0xf]
    %v451 = vpack.c.bf16 %v434, %v434
    %v452 = vlaneseq
    %v453 = vshrl.u32 %v452, 7
    %v454 = vsub.s32 2, %v453
    %v455 = vrot.slane %v62, %v454
    %457 = vrot.lane.b32.xlu0 %v451, 32
    %v458 = vpop.permute.xlu0 %457
    %v463 = vunpack.c.l.b16 %v447
    %v464 = vunpack.c.l.b16 %v448
    %v465 = vunpack.c.l.b16 %v449
    %v466 = vunpack.c.l.b16 %v450
    %v467 = vpack.c.b16 %v464, %v463
    %v468 = vpack.c.b16 %v466, %v465
    %v472 = vsel %vm186, %v458, 0
    %474 = vmatprep.subr.bf16.mxu0 0
    %475 = vmatpush1.bf16.msra.mxu0 0
    %476 = vmatprep.subr.bf16.mxu0 0
    %477 = vmatpush1.bf16.msra.mxu0 0
    %478 = vmatprep.subr.bf16.mxu0 0
    %479 = vmatpush1.bf16.msra.mxu0 0
    %480 = vmatprep.subr.bf16.mxu0 0
    %481 = vmatpush1.bf16.msra.mxu0 0
    %482 = vmatprep.subr.bf16.mxu0 0
    %483 = vmatpush1.bf16.msra.mxu0 0
    %484 = vmatprep.subr.bf16.mxu0 0
    %485 = vmatpush1.bf16.msra.mxu0 0
    %486 = vmatprep.subr.bf16.mxu0 0
    %487 = vmatpush1.bf16.msra.mxu0 %v468
    %488 = vmatprep.subr.bf16.mxu0 0
    %489 = vmatpush1.bf16.msra.mxu0 %v467
    %490 = vmatprep.subr.bf16.mxu0 0
    %491 = vmatpush2.bf16.msra.mxu0 0
    %492 = vmatprep.subr.bf16.mxu0 0
    %493 = vmatpush2.bf16.msra.mxu0 0
    %494 = vmatprep.subr.bf16.mxu0 0
    %495 = vmatpush2.bf16.msra.mxu0 0
    %496 = vmatprep.subr.bf16.mxu0 0
    %497 = vmatpush2.bf16.msra.mxu0 0
    %498 = vmatprep.subr.bf16.mxu0 0
    %499 = vmatpush2.bf16.msra.mxu0 0
    %500 = vmatprep.subr.bf16.mxu0 0
    %501 = vmatpush2.bf16.msra.mxu0 0
    %502 = vmatprep.subr.bf16.mxu0 0
    %503 = vmatpush2.bf16.msra.mxu0 0
    %504 = vmatprep.subr.bf16.mxu0 0
    %505 = vmatpush2.bf16.msra.mxu0 0
    %506 = vmatprep.mubr.bf16.mxu0 0
    %507 = vmatmul.mubr.bf16.gmra.mxu0 %v472
    %v508 = vpop.f32.mrf.mxu0
    %v509 = vadd.f32 %v455, %v508
    %v510 = vpop.f32.mrf.mxu0
    %v511 = vpop.f32.mrf.mxu0
    %v512 = vpop.f32.mrf.mxu0
    %513 = vdwg.mxu0
    %v514 = vstv %s49
    %v515 = vmul.f32 %v509, %v514
    %v516 = vld [vmem:[%s1 + $0x8] sm:$0xff]
    %v517 = vadd.f32 %v516, %v515
    %518 = vst [vmem:[#allocation8] sm:$0xff] %v517
    // Predicated region
    $region26: #{tpu_custom_call.1} parent=1 // pred_check
      _
    $region27: #{tpu_custom_call.1} parent=1 // pred_check_branch
      %520 = sbr.rel (0) target = $region29
    $region28: #{tpu_custom_call.1} parent=1 // pred_region
      %s522 = ssub.s32 128, 128
      %523 = vsyncadd [#allocation5], %s522
      %s525 = sshll.u32 [#allocation8], 4
      %s526 = int_to_ptr.vmem [resolvable:$true] %s525
      %528 = dma.vmem_to_hbm [thread:$0]  %s526, 128, %s4, [#allocation5]
    $region29: #{tpu_custom_call.1} parent=1 // pred_fallthru
      _
    // Predicated region
    $region30: #{tpu_custom_call.1} parent=1 // pred_check
      _
    $region31: #{tpu_custom_call.1} parent=1 // pred_check_branch
      %530 = sbr.rel (0) target = $region33
    $region32: #{tpu_custom_call.1} parent=1 // pred_region
      %s532 = ssub.s32 128, 128
      %533 = vsyncadd [#allocation10], %s532
      %s535 = sshll.u32 [#allocation9], 4
      %s536 = int_to_ptr.vmem [resolvable:$true] %s535
      %538 = dma.vmem_to_hbm [thread:$0]  %s536, 128, %s5, [#allocation10]
    $region33: #{tpu_custom_call.1} parent=1 // pred_fallthru
      _
    // Predicated region
    $region34: #{tpu_custom_call.1} parent=1 // pred_check
      _
    $region35: #{tpu_custom_call.1} parent=1 // pred_check_branch
      %540 = sbr.rel (0) target = $region37
    $region36: #{tpu_custom_call.1} parent=1 // pred_region
      %541 = dma.done [#allocation5], 128
    $region37: #{tpu_custom_call.1} parent=1 // pred_fallthru
      _
    // Predicated region
    $region38: #{tpu_custom_call.1} parent=1 // pred_check
      _
    $region39: #{tpu_custom_call.1} parent=1 // pred_check_branch
      %543 = sbr.rel (0) target = $region41
    $region40: #{tpu_custom_call.1} parent=1 // pred_region
      %544 = dma.done [#allocation10], 128
    $region41: #{tpu_custom_call.1} parent=1 // pred_fallthru
      _
    %545 = vsyncpa [#allocation4], 1
    %546 = vsyncpa [#allocation7], 1
    %547 = vsyncpa [#allocation5], 1
    %548 = vsyncpa [#allocation10], 1

</llo_original>
